<compile_context>
chip_gen: v6e
topology: v6e:2x2x1
jax: 0.10.0
libtpu: 0.0.40
codegen_flags: <defaults>
</compile_context>

<pallas_src>
import jax
import jax.numpy as jnp
from jax.experimental import pallas as pl
from jax.experimental.pallas import tpu as pltpu


def _round_up(a, m):
    return (a + m - 1) // m * m


def _plain_lr_kernel(x_ref, w_ref, b_ref, o_ref):
    # x_ref: (tile_rows, Fk) VMEM  -- batch rows on sublanes, features on lanes
    # w_ref: (Fk, k)         VMEM  -- resident weight (block-diagonal if packed)
    # b_ref: (1,)            SMEM  -- scalar bias
    # o_ref: (tile_rows, k)  VMEM  -- probabilities for this batch tile
    z = jnp.dot(x_ref[...], w_ref[...], preferred_element_type=jnp.float32) + b_ref[0]
    o_ref[...] = (1.0 / (1.0 + jnp.exp(-z))).astype(o_ref.dtype)


def plain_lr(x, weight, bias, *, target_tile_bytes=4 << 20):
    """sigmoid(x @ weight.T + bias), matching torch sigmoid(nn.Linear(F, 1)(x)).

    x:      (B, F) float32
    weight: (1, F) float32  (torch Linear weight layout)
    bias:   (1,)   float32
    returns (B, 1) float32
    """
    B, F = x.shape
    assert weight.shape == (1, F)
    itemsize = jnp.dtype(x.dtype).itemsize
    out_dtype = x.dtype

    # --- small-F packing: fold k rows into one lane-dense VMEM row ----------------
    k = 1
    if F <= 128:
        for cand in range(128 // F, 1, -1):
            if B % cand == 0:
                k = cand
                break
    Fk = k * F
    Bp = B // k

    w_vec = jnp.asarray(weight, x.dtype).reshape(F)
    if k == 1:
        x_in = x
        w_mat = w_vec.reshape(F, 1)
    else:
        x_in = x.reshape(Bp, Fk)                      # free row-major reshape (no copy)
        eye = jnp.eye(k, dtype=x.dtype)               # block-diagonal weight, built once
        w_mat = (eye[:, None, :] * w_vec[None, :, None]).reshape(Fk, k)
    b_smem = jnp.asarray(bias, jnp.float32).reshape(1)

    # --- byte-targeted tile sizing (lane-padding aware) ----------------------------
    lane_row_bytes = _round_up(Fk, 128) * itemsize
    tile_rows = max(8, (target_tile_bytes // lane_row_bytes) // 8 * 8)
    if tile_rows >= 128:
        tile_rows = tile_rows // 128 * 128
    # keep >= 4 tiles for large batches so the "parallel" axis feeds both v7x TCs
    if Bp >= 4 * 128:
        tile_rows = min(tile_rows, max(128, (Bp // 4) // 128 * 128))
    if tile_rows >= Bp:
        tile_rows = Bp                                # single full-array block
    num_tiles = pl.cdiv(Bp, tile_rows)                # ragged last block, no jnp.pad
    # TODO(synk): for very large F where even an 8-row tile exceeds VMEM, add a
    # trailing "arbitrary" K grid axis with an f32 accumulator scratch.

    # --- explicit VMEM budget (double-buffered, lane/sublane padded) ---------------
    x_tile_b = _round_up(tile_rows, 8) * lane_row_bytes
    w_b = _round_up(Fk, 8) * _round_up(k, 128) * itemsize
    o_tile_b = _round_up(tile_rows, 8) * _round_up(k, 128) * jnp.dtype(out_dtype).itemsize
    vmem_needed = 2 * (x_tile_b + w_b + o_tile_b)
    vmem_limit = int(min(48 << 20, max(16 << 20, int(vmem_needed * 1.5) + (2 << 20))))

    out = pl.pallas_call(
        _plain_lr_kernel,
        out_shape=jax.ShapeDtypeStruct((Bp, k), out_dtype),
        grid_spec=pltpu.PrefetchScalarGridSpec(
            num_scalar_prefetch=0,
            grid=(num_tiles,),
            in_specs=[
                # batch tile: streamed + double-buffered across the grid
                pl.BlockSpec((tile_rows, Fk), lambda i: (i, 0)),
                # weight: constant block index -> stays resident in VMEM
                pl.BlockSpec((Fk, k), lambda i: (0, 0)),
                # bias: single scalar in SMEM (no VMEM block, no pipeline slot)
                pl.BlockSpec(memory_space=pltpu.MemorySpace.SMEM),
            ],
            out_specs=pl.BlockSpec((tile_rows, k), lambda i: (i, 0)),
        ),
        compiler_params=pltpu.CompilerParams(
            dimension_semantics=("parallel",),        # tiles independent -> megacore split
            vmem_limit_bytes=vmem_limit,
        ),
    )(x_in, w_mat, b_smem)

    # (Bp, k) row-major is exactly original batch order; back to torch's (B, 1).
    return out.reshape(B, 1)


if __name__ == "__main__":
    key = jax.random.PRNGKey(0)

    # Small shapes consistent with the module: batch=8, n_features=32.
    B, F = 8, 32
    k_x, k_w, k_b = jax.random.split(key, 3)
    x = jax.random.normal(k_x, (B, F), dtype=jnp.float32)
    # Deterministic init mimicking torch.nn.Linear default: U(-1/sqrt(F), 1/sqrt(F))
    bound = 1.0 / (F ** 0.5)
    weight = jax.random.uniform(k_w, (1, F), minval=-bound, maxval=bound, dtype=jnp.float32)
    bias = jax.random.uniform(k_b, (1,), minval=-bound, maxval=bound, dtype=jnp.float32)

    out = jax.block_until_ready(plain_lr(x, weight, bias))
    ref = jax.nn.sigmoid(x @ weight.T + bias)
    assert out.shape == (B, 1)
    assert jnp.allclose(out, ref, atol=1e-5, rtol=1e-5)

    # Packed (k=3) + ragged multi-tile path: B not tile-aligned, F not 128-aligned.
    B2, F2 = 300, 40
    k_x2, k_w2, k_b2 = jax.random.split(jax.random.PRNGKey(1), 3)
    x2 = jax.random.normal(k_x2, (B2, F2), dtype=jnp.float32)
    bound2 = 1.0 / (F2 ** 0.5)
    w2 = jax.random.uniform(k_w2, (1, F2), minval=-bound2, maxval=bound2, dtype=jnp.float32)
    b2 = jax.random.uniform(k_b2, (1,), minval=-bound2, maxval=bound2, dtype=jnp.float32)
    out2 = jax.block_until_ready(plain_lr(x2, w2, b2, target_tile_bytes=16 * 1024))
    ref2 = jax.nn.sigmoid(x2 @ w2.T + b2)
    assert out2.shape == (B2, 1)
    assert jnp.allclose(out2, ref2, atol=1e-5, rtol=1e-5)

    # Unpacked (k=1) path: F > 64 and batch not a multiple of 8 (single full block).
    B3, F3 = 77, 200
    k_x3, k_w3, k_b3 = jax.random.split(jax.random.PRNGKey(2), 3)
    x3 = jax.random.normal(k_x3, (B3, F3), dtype=jnp.float32)
    bound3 = 1.0 / (F3 ** 0.5)
    w3 = jax.random.uniform(k_w3, (1, F3), minval=-bound3, maxval=bound3, dtype=jnp.float32)
    b3 = jax.random.uniform(k_b3, (1,), minval=-bound3, maxval=bound3, dtype=jnp.float32)
    out3 = jax.block_until_ready(plain_lr(x3, w3, b3))
    ref3 = jax.nn.sigmoid(x3 @ w3.T + b3)
    assert out3.shape == (B3, 1)
    assert jnp.allclose(out3, ref3, atol=1e-5, rtol=1e-5)

    print("KERNEL_OK")
</pallas_src>

<mosaic_0001>
module attributes {stable_mosaic.version = 11 : i64} {
  func.func @_plain_lr_kernel(%arg0: i32, %arg1: memref<2x128xf32, #tpu.memory_space<vmem>>, %arg2: memref<128x4xf32, #tpu.memory_space<vmem>>, %arg3: memref<1xf32, #tpu.memory_space<smem>>, %arg4: memref<2x4xf32, #tpu.memory_space<vmem>>) attributes {dimension_semantics = [#tpu.dimension_semantics<parallel>], iteration_bounds = array<i64: 1>, scalar_prefetch = 0 : i64, scratch_operands = 0 : i64, tpu.core_type = #tpu.core_type<tc>, window_params = [{transform_indices = @transform_0, window_bounds = array<i64: 2, 128>}, {pipeline_mode = #tpu.pipeline_mode<synchronous>, transform_indices = @transform_1, window_bounds = array<i64: 128, 4>}, {transform_indices = @transform_2, window_bounds = array<i64: 1>}, {transform_indices = @transform_3, window_bounds = array<i64: 2, 4>}]} {
    %c0 = arith.constant 0 : index
    %c0_0 = arith.constant 0 : index
    %0 = vector.load %arg1[%c0, %c0_0] : memref<2x128xf32, #tpu.memory_space<vmem>>, vector<2x128xf32>
    %c0_1 = arith.constant 0 : index
    %c0_2 = arith.constant 0 : index
    %1 = vector.load %arg2[%c0_1, %c0_2] : memref<128x4xf32, #tpu.memory_space<vmem>>, vector<128x4xf32>
    %cst = arith.constant dense<0.000000e+00> : vector<2x4xf32>
    %2 = tpu.matmul %0, %1, %cst {dimension_numbers = #tpu.dot_dimension_numbers<[1], [0], [0], [1], [0, 0, 1, 1], [], []>} : vector<2x128xf32>, vector<128x4xf32>, vector<2x4xf32> -> vector<2x4xf32>
    %c0_3 = arith.constant 0 : index
    %3 = memref.load %arg3[%c0_3] : memref<1xf32, #tpu.memory_space<smem>>
    %4 = vector.broadcast %3 : f32 to vector<2x4xf32>
    %5 = arith.addf %2, %4 : vector<2x4xf32>
    %cst_4 = arith.constant 0.000000e+00 : f32
    %6 = vector.broadcast %cst_4 : f32 to vector<2x4xf32>
    %7 = arith.subf %6, %5 : vector<2x4xf32>
    %8 = math.exp %7 : vector<2x4xf32>
    %cst_5 = arith.constant 1.000000e+00 : f32
    %9 = vector.broadcast %cst_5 : f32 to vector<2x4xf32>
    %10 = arith.addf %9, %8 : vector<2x4xf32>
    %cst_6 = arith.constant 1.000000e+00 : f32
    %11 = vector.broadcast %cst_6 : f32 to vector<2x4xf32>
    %12 = arith.divf %11, %10 : vector<2x4xf32>
    %c0_7 = arith.constant 0 : index
    %c0_8 = arith.constant 0 : index
    %13 = vector.load %arg4[%c0_7, %c0_8] : memref<2x4xf32, #tpu.memory_space<vmem>>, vector<2x4xf32>
    tpu.vector_store %arg4[%c0_7, %c0_8], %12 {strides = array<i32>} : memref<2x4xf32, #tpu.memory_space<vmem>>, vector<2x4xf32>,
    return
  }
  func.func @transform_0(%arg0: i32) -> (i32, i32) {
    %c0_i32 = arith.constant 0 : i32
    %c0_i32_0 = arith.constant 0 : i32
    return %arg0, %c0_i32 : i32, i32
  }
  func.func @transform_1(%arg0: i32) -> (i32, i32) {
    %c0_i32 = arith.constant 0 : i32
    %c0_i32_0 = arith.constant 0 : i32
    %c0_i32_1 = arith.constant 0 : i32
    return %c0_i32, %c0_i32_0 : i32, i32
  }
  func.func @transform_2(%arg0: i32) -> i32 {
    %c0_i32 = arith.constant 0 : i32
    %c0_i32_0 = arith.constant 0 : i32
    return %c0_i32 : i32
  }
  func.func @transform_3(%arg0: i32) -> (i32, i32) {
    %c0_i32 = arith.constant 0 : i32
    %c0_i32_0 = arith.constant 0 : i32
    return %arg0, %c0_i32 : i32, i32
  }
}

</mosaic_0001>

<llo_original>
// kernel: tpu_custom_call.1
$region0: #{tpu_custom_call.1}
  #allocation0 [shape = 'u32[]', space=smem, size = 0x4, offset = 0x4, fixed_abs, tag = 'smem constant byte address 0x4 - core index']
  #allocation1 [shape = 'u32[144,128]{1,0:T(1,128)}', space=vmem, size = 0x12000, scoped, tag = 'internal scratch']
  #allocation2 [shape = 'f32[1]{0:T(128)S(6)}', space=smem, size = 0x200, scoped, tag = 'scoped memory for tpu_custom_call.1']
  %s0 = inlined_call_operand.vmem [shape: f32[2,128], index: 0, kind: input, shape index: {}]
  %s1 = inlined_call_operand.vmem [shape: f32[128,4], index: 1, kind: input, shape index: {}]
  %s2 = inlined_call_operand.<no memory space> [shape: f32[1], index: 2, kind: input, shape index: {}]
  %s3 = inlined_call_operand.hbm [shape: f32[2,4], index: 3, kind: output, shape index: {}]
  %s4 = sld [smem:[#allocation0]]
  $region22: #{tpu_custom_call.1} parent=0
    _
  %s6 = ssub.s32 1, %s4
  %s7 = scalar_select 0, %s6, %s4
  %8 = sst [smem:[#allocation2]] %s2
  $region1: #{tpu_custom_call.1} parent=0
    #allocation3 [shape = 'u8[1024]{0}', space=vmem, size = 0x400, scoped, tag = 'output window, operand 0, single buffered']
    #allocation4 [shape = 's32[1]{0}', space=sflag, size = 0x4, scoped, tag = 'scoped memory for tpu_custom_call.1']
    %9 = vsyncpa [#allocation4], 0
    // Predicated region
    $region2: #{tpu_custom_call.1} parent=1 // pred_check
      _
    $region3: #{tpu_custom_call.1} parent=1 // pred_check_branch
      %11 = sbr.rel (0) target = $region5
    $region4: #{tpu_custom_call.1} parent=1 // pred_region
      _
    $region5: #{tpu_custom_call.1} parent=1 // pred_fallthru
      _
    // Predicated region
    $region6: #{tpu_custom_call.1} parent=1 // pred_check
      _
    $region7: #{tpu_custom_call.1} parent=1 // pred_check_branch
      %13 = sbr.rel (0) target = $region9
    $region8: #{tpu_custom_call.1} parent=1 // pred_region
      _
    $region9: #{tpu_custom_call.1} parent=1 // pred_fallthru
      _
    // Predicated region
    $region10: #{tpu_custom_call.1} parent=1 // pred_check
      _
    $region11: #{tpu_custom_call.1} parent=1 // pred_check_branch
      %15 = sbr.rel (0) target = $region13
    $region12: #{tpu_custom_call.1} parent=1 // pred_region
      _
    $region13: #{tpu_custom_call.1} parent=1 // pred_fallthru
      _
    %v16 = vld [vmem:[%s0] sm:$0x3]
    %v17 = vld [vmem:[%s1] sm:$0xff]
    %v18 = vld [vmem:[%s1 + $0x8] sm:$0xff]
    %v19 = vld [vmem:[%s1 + $0x10] sm:$0xff]
    %v20 = vld [vmem:[%s1 + $0x18] sm:$0xff]
    %v21 = vld [vmem:[%s1 + $0x20] sm:$0xff]
    %v22 = vld [vmem:[%s1 + $0x28] sm:$0xff]
    %v23 = vld [vmem:[%s1 + $0x30] sm:$0xff]
    %v24 = vld [vmem:[%s1 + $0x38] sm:$0xff]
    %v25 = vld [vmem:[%s1 + $0x40] sm:$0xff]
    %v26 = vld [vmem:[%s1 + $0x48] sm:$0xff]
    %v27 = vld [vmem:[%s1 + $0x50] sm:$0xff]
    %v28 = vld [vmem:[%s1 + $0x58] sm:$0xff]
    %v29 = vld [vmem:[%s1 + $0x60] sm:$0xff]
    %v30 = vld [vmem:[%s1 + $0x68] sm:$0xff]
    %v31 = vld [vmem:[%s1 + $0x70] sm:$0xff]
    %v32 = vld [vmem:[%s1 + $0x78] sm:$0xff]
    %s33 = sld [smem:[#allocation2]]
    %v34 = vstv %s33
    %35 = vmatprep.subr.mxu0 0.0
    %36 = vmatpush1.msra.mxu0 %v32
    %37 = vmatprep.subr.mxu0 0.0
    %38 = vmatpush1.msra.mxu0 %v31
    %39 = vmatprep.subr.mxu0 0.0
    %40 = vmatpush1.msra.mxu0 %v30
    %41 = vmatprep.subr.mxu0 0.0
    %42 = vmatpush1.msra.mxu0 %v29
    %43 = vmatprep.subr.mxu0 0.0
    %44 = vmatpush1.msra.mxu0 %v28
    %45 = vmatprep.subr.mxu0 0.0
    %46 = vmatpush1.msra.mxu0 %v27
    %47 = vmatprep.subr.mxu0 0.0
    %48 = vmatpush1.msra.mxu0 %v26
    %49 = vmatprep.subr.mxu0 0.0
    %50 = vmatpush1.msra.mxu0 %v25
    %51 = vmatprep.subr.mxu0 0.0
    %52 = vmatpush1.msra.mxu0 %v24
    %53 = vmatprep.subr.mxu0 0.0
    %54 = vmatpush1.msra.mxu0 %v23
    %55 = vmatprep.subr.mxu0 0.0
    %56 = vmatpush1.msra.mxu0 %v22
    %57 = vmatprep.subr.mxu0 0.0
    %58 = vmatpush1.msra.mxu0 %v21
    %59 = vmatprep.subr.mxu0 0.0
    %60 = vmatpush1.msra.mxu0 %v20
    %61 = vmatprep.subr.mxu0 0.0
    %62 = vmatpush1.msra.mxu0 %v19
    %63 = vmatprep.subr.mxu0 0.0
    %64 = vmatpush1.msra.mxu0 %v18
    %65 = vmatprep.subr.mxu0 0.0
    %66 = vmatpush1.msra.mxu0 %v17
    %67 = vmatprep.subr.mxu0 0.0
    %68 = vmatpush2.msra.mxu0 0.0
    %69 = vmatprep.subr.mxu0 0.0
    %70 = vmatpush2.msra.mxu0 0.0
    %71 = vmatprep.subr.mxu0 0.0
    %72 = vmatpush2.msra.mxu0 0.0
    %73 = vmatprep.subr.mxu0 0.0
    %74 = vmatpush2.msra.mxu0 0.0
    %75 = vmatprep.subr.mxu0 0.0
    %76 = vmatpush2.msra.mxu0 0.0
    %77 = vmatprep.subr.mxu0 0.0
    %78 = vmatpush2.msra.mxu0 0.0
    %79 = vmatprep.subr.mxu0 0.0
    %80 = vmatpush2.msra.mxu0 0.0
    %81 = vmatprep.subr.mxu0 0.0
    %82 = vmatpush2.msra.mxu0 0.0
    %83 = vmatprep.subr.mxu0 0.0
    %84 = vmatpush2.msra.mxu0 0.0
    %85 = vmatprep.subr.mxu0 0.0
    %86 = vmatpush2.msra.mxu0 0.0
    %87 = vmatprep.subr.mxu0 0.0
    %88 = vmatpush2.msra.mxu0 0.0
    %89 = vmatprep.subr.mxu0 0.0
    %90 = vmatpush2.msra.mxu0 0.0
    %91 = vmatprep.subr.mxu0 0.0
    %92 = vmatpush2.msra.mxu0 0.0
    %93 = vmatprep.subr.mxu0 0.0
    %94 = vmatpush2.msra.mxu0 0.0
    %95 = vmatprep.subr.mxu0 0.0
    %96 = vmatpush2.msra.mxu0 0.0
    %97 = vmatprep.subr.mxu0 0.0
    %98 = vmatpush2.msra.mxu0 0.0
    %99 = vmatprep.mubr.f32.mxu0 0.0
    %100 = vmatmul.mubr.f32.gmra.mxu0 %v16
    %v101 = vpop.f32.mrf.mxu0
    %v102 = vadd.f32 %v34, %v101
    %v103 = vpop.f32.mrf.mxu0
    %104 = vdwg.mxu0
    %v105 = vsub.f32 0.0, %v102
    %v106 = vmul.f32 %v105, 1.442695
    %v107 = vpow.pop %v106
    %v108 = vadd.f32 %v107, 1.0
    %v109 = vrcp.pop %v108
    %v110 = vmul.f32 1.0, %v109
    %vm111 = vcmask 25600
    %112 = vst.msk [vmem:[#allocation3] sm:$0x3] %vm111, %v110
    // Predicated region
    $region14: #{tpu_custom_call.1} parent=1 // pred_check
      _
    $region15: #{tpu_custom_call.1} parent=1 // pred_check_branch
      %114 = sbr.rel (0) target = $region17
    $region16: #{tpu_custom_call.1} parent=1 // pred_region
      %s116 = ssub.s32 32, 32
      %117 = vsyncadd [#allocation4], %s116
      %s119 = sshll.u32 [#allocation3], 4
      %s120 = int_to_ptr.vmem [resolvable:$true] %s119
      %122 = dma.vmem_to_hbm [thread:$0]  %s120, 32, %s3, [#allocation4]
    $region17: #{tpu_custom_call.1} parent=1 // pred_fallthru
      _
    // Predicated region
    $region18: #{tpu_custom_call.1} parent=1 // pred_check
      _
    $region19: #{tpu_custom_call.1} parent=1 // pred_check_branch
      %124 = sbr.rel (0) target = $region21
    $region20: #{tpu_custom_call.1} parent=1 // pred_region
      %125 = dma.done [#allocation4], 32
    $region21: #{tpu_custom_call.1} parent=1 // pred_fallthru
      _
    %126 = vsyncpa [#allocation4], 1

</llo_original>
